<compile_context>
chip_gen: v6e
topology: v6e:2x2x1
jax: 0.10.0
libtpu: 0.0.40
codegen_flags: <defaults>
</compile_context>

<pallas_src>
import functools
import math

import jax
import jax.numpy as jnp
import numpy as np
from jax.experimental import pallas as pl
from jax.experimental.pallas import tpu as pltpu


# ---------------------------------------------------------------------------
# Kernel bodies
# ---------------------------------------------------------------------------


def _channel_conv_sigmoid(pooled_sum, w_ref, K):
    """K-tap zero-padded cross-correlation over channels (axis 1) + sigmoid.

    pooled_sum: f32, channels on axis 1 (ndim 2 or 3), per-channel *sum* over H
                (the 1/H of the average pool is pre-folded into the taps).
    w_ref:      (K,) f32 conv taps in SMEM, already scaled by 1/H.
    """
    C = pooled_sum.shape[1]
    pad = K // 2
    if pad > 0:
        zshape = list(pooled_sum.shape)
        zshape[1] = pad
        z = jnp.zeros(zshape, pooled_sum.dtype)
        padded = jnp.concatenate([z, pooled_sum, z], axis=1)
    else:
        padded = pooled_sum

    def sl(a, j):  # static slice of C channels starting at j along axis 1
        return a[:, j:j + C] if a.ndim == 2 else a[:, j:j + C, :]

    conv = w_ref[0] * sl(padded, 0)
    for j in range(1, K):  # K is small & static -> unrolled taps
        conv = conv + w_ref[j] * sl(padded, j)
    return jax.nn.sigmoid(conv)


def _eca_flat_kernel(x_ref, p_ref, e_ref, w_ref, o_ref, *, K):
    """Lane-dense path (used when H % 128 != 0).

    x_ref/o_ref: (TB, C*H) blocks of x viewed as (B, C*H): the flat last dim
                 keeps loads/stores unmasked full-lane vld/vst instead of
                 H/128-utilized masked stores with an 8x-padded VMEM layout.
    p_ref: (C*H, C) one-hot pooling matrix   (P[c*H+h, c] = 1).
    e_ref: (C, C*H) one-hot expansion matrix (E[c, c*H+h] = 1).
    w_ref: (K,) f32 conv taps in SMEM, pre-scaled by 1/H.
    The two matmuls run on the otherwise-idle MXU and hide under the HBM DMAs.
    """
    x = x_ref[...]
    # Per-channel sum over H: (TB, C*H) @ (C*H, C) -> (TB, C) f32.
    pooled_sum = jnp.dot(x, p_ref[...], preferred_element_type=jnp.float32)
    gate = _channel_conv_sigmoid(pooled_sum, w_ref, K)           # (TB, C) f32
    # Expand the gate back to the flat slab: (TB, C) @ (C, C*H) -> (TB, C*H).
    gate_flat = jnp.dot(gate.astype(x.dtype), e_ref[...],
                        preferred_element_type=jnp.float32)
    o_ref[...] = x * gate_flat.astype(x.dtype)


def _eca_nat_kernel(x_ref, w_ref, o_ref, *, K):
    """Natural-layout path (H % 128 == 0, already lane-dense).

    x_ref/o_ref: (TB, C, H) blocks; w_ref: (K,) f32 SMEM taps pre-scaled by 1/H.
    """
    x = x_ref[...]
    # f32-accumulating reduce over H; only the tiny (TB, C, 1) vector is f32.
    pooled_sum = jnp.sum(x, axis=-1, keepdims=True, dtype=jnp.float32)
    gate = _channel_conv_sigmoid(pooled_sum, w_ref, K)           # (TB, C, 1) f32
    # Stride-0 lane broadcast of the per-channel gate over H.
    o_ref[...] = x * gate.astype(x.dtype)


# ---------------------------------------------------------------------------
# Wrapper
# ---------------------------------------------------------------------------


def _round_up(v, m):
    return ((v + m - 1) // m) * m


def _pick_batch_tile(B, per_batch_vmem_bytes, align, target_bytes):
    """Batch-tile size targeting ~`target_bytes` blocks.

    Big blocks amortize the ~0.35 us/step grid overhead (tiny blocks reach only
    a few % of HBM roofline); ~2 MiB default keeps double-buffered in+out well
    under VMEM even on v7x (64 MiB).  Prefers an exact divisor of B so the grid
    divides evenly; otherwise the wrapper pads the batch.
    """
    tb_max = max(1, target_bytes // max(per_batch_vmem_bytes, 1))
    if tb_max >= B:
        return B
    best = 0
    d = 1
    while d * d <= B:
        if B % d == 0:
            for cand in (d, B // d):
                if cand <= tb_max and cand % align == 0 and cand > best:
                    best = cand
        d += 1
    if best * 4 >= tb_max:          # a divisor close enough to the target
        return best
    # No good divisor: use an aligned tile near the target; batch gets padded.
    return max(align, (tb_max // align) * align)


def _compiler_params(vmem_needed_bytes):
    kwargs = dict(dimension_semantics=("parallel",))   # v7x: both TCs split batch tiles
    if vmem_needed_bytes > 16 * 1024 * 1024:
        # Raise the scoped-VMEM limit only when large blocks actually need it.
        kwargs["vmem_limit_bytes"] = int(min(vmem_needed_bytes, 64 * 1024 * 1024))
    return pltpu.CompilerParams(**kwargs)


def eca_block_1d(x, conv_weight, *, target_block_bytes=2 * 1024 * 1024):
    """ECA forward. x: (B, C, H); conv_weight: (K,) (torch Conv1d(1,1,K).weight squeezed)."""
    B, C, H = x.shape
    K = int(conv_weight.shape[0])
    itemsize = jnp.dtype(x.dtype).itemsize
    N = C * H

    # Fold the 1/H of the average pool into the conv taps: the kernel then only
    # needs a per-channel *sum* over H (no divide / extra temp per step).
    w_scaled = conv_weight.astype(jnp.float32) / np.float32(H)

    # Sublane alignment for a batch tile sitting on the second-minor axis.
    sub_align = {4: 8, 2: 16, 1: 32}.get(itemsize, 8)

    cost = pl.CostEstimate(
        flops=4 * B * N + 2 * B * C * K,
        transcendentals=B * C,
        bytes_accessed=2 * B * N * itemsize + 4 * K,
    )

    one_hot_bytes = N * C * itemsize
    use_flat = (H % 128 != 0) and (one_hot_bytes <= 2 * 1024 * 1024)

    if use_flat:
        # ---- lane-dense flat path ------------------------------------------
        x2 = x.reshape(B, N)                     # free: collapses contiguous dims
        tb = _pick_batch_tile(B, _round_up(N, 128) * itemsize, sub_align,
                              target_block_bytes)
        Bp = pl.cdiv(B, tb) * tb
        if Bp != B:                              # pad so the grid divides evenly
            x2 = jnp.pad(x2, ((0, Bp - B), (0, 0)))

        ch = np.arange(N) // H                   # channel id of each flat position
        pool_mat = jnp.asarray(ch[:, None] == np.arange(C)[None, :], dtype=x.dtype)
        expand_mat = jnp.asarray(np.arange(C)[:, None] == ch[None, :], dtype=x.dtype)

        vmem_needed = (4 * tb * _round_up(N, 128) * itemsize   # in+out, double-buffered
                       + 2 * tb * _round_up(N, 128) * 4        # f32 gate slab + slack
                       + 8 * one_hot_bytes)

        out2 = pl.pallas_call(
            functools.partial(_eca_flat_kernel, K=K),
            out_shape=jax.ShapeDtypeStruct((int(Bp), N), x.dtype),
            grid=(int(Bp) // tb,),
            in_specs=[
                pl.BlockSpec((tb, N), lambda i: (i, 0)),
                pl.BlockSpec((N, C), lambda i: (0, 0)),        # resident across steps
                pl.BlockSpec((C, N), lambda i: (0, 0)),        # resident across steps
                pl.BlockSpec(memory_space=pltpu.MemorySpace.SMEM),
            ],
            out_specs=pl.BlockSpec((tb, N), lambda i: (i, 0)),
            compiler_params=_compiler_params(vmem_needed),
            cost_estimate=cost,
        )(x2, pool_mat, expand_mat, w_scaled)
        return out2[:B].reshape(B, C, H)

    # ---- natural-layout path (H % 128 == 0, or C*H too large for the one-hot
    # matrices) ----------------------------------------------------------------
    # TODO(synk): for very large per-batch C*H (VMEM-bound first on v7x's 64 MiB),
    # split into a pooled/gate pass plus an apply pass tiled over (B, C-tiles,
    # H-tiles) with both axes parallel.
    per_batch_vmem = _round_up(C, sub_align) * _round_up(H, 128) * itemsize
    tb = _pick_batch_tile(B, per_batch_vmem, 1, target_block_bytes)
    Bp = pl.cdiv(B, tb) * tb
    x_in = x
    if Bp != B:
        x_in = jnp.pad(x, ((0, Bp - B), (0, 0), (0, 0)))
    vmem_needed = 4 * tb * per_batch_vmem + (1 << 20)

    out = pl.pallas_call(
        functools.partial(_eca_nat_kernel, K=K),
        out_shape=jax.ShapeDtypeStruct((int(Bp), C, H), x.dtype),
        grid=(int(Bp) // tb,),
        in_specs=[
            pl.BlockSpec((tb, C, H), lambda i: (i, 0, 0)),
            pl.BlockSpec(memory_space=pltpu.MemorySpace.SMEM),
        ],
        out_specs=pl.BlockSpec((tb, C, H), lambda i: (i, 0, 0)),
        compiler_params=_compiler_params(vmem_needed),
        cost_estimate=cost,
    )(x_in, w_scaled)
    return out[:B]


# ---------------------------------------------------------------------------
# Reference & demo
# ---------------------------------------------------------------------------


def _eca_ref(x, w):
    """Pure-JAX reference mirroring the PyTorch module's forward."""
    K = w.shape[0]
    pad = K // 2
    C = x.shape[1]
    pooled = jnp.mean(x.astype(jnp.float32), axis=-1)            # (B, C)
    padded = jnp.pad(pooled, ((0, 0), (pad, pad)))
    conv = sum(w[j] * padded[:, j:j + C] for j in range(K))
    gate = jax.nn.sigmoid(conv)
    return x * gate[:, :, None].astype(x.dtype)


def _eca_kernel_size(channels, b=1, gamma=2):
    k = int(abs((math.log(channels, 2) + b) / gamma))
    if k % 2 == 0:
        k += 1
    return k


if __name__ == "__main__":
    def run_case(B, C, H, *, target_block_bytes=2 * 1024 * 1024, tol=1e-5, tag=""):
        K = _eca_kernel_size(C)
        key = jax.random.fold_in(jax.random.PRNGKey(0), B * 100003 + C * 131 + H)
        kx, kw = jax.random.split(key)
        x = jax.random.normal(kx, (B, C, H), dtype=jnp.float32)
        # Deterministic Conv1d(1,1,K,bias=False) weight ((1,1,K) in torch -> (K,)).
        w = jax.random.normal(kw, (K,), dtype=jnp.float32) * 0.5
        out = jax.block_until_ready(
            eca_block_1d(x, w, target_block_bytes=target_block_bytes))
        ref = _eca_ref(x, w)
        np.testing.assert_allclose(np.asarray(out), np.asarray(ref),
                                   rtol=tol, atol=tol, err_msg=tag)

    # Primary small example consistent with the module (C=32 -> kernel_size 3).
    # H=16 < 128 -> lane-dense flat path; tolerance covers MXU f32 multi-pass
    # rounding in the one-hot pooling/expansion matmuls.
    run_case(2, 32, 16, tol=2e-3, tag="flat path")
    # Natural-layout path: H already a multiple of 128 (lane-dense as-is).
    run_case(4, 16, 128, tol=1e-5, tag="natural path")
    # Multi-step grid + batch padding on the flat path (tiny block budget).
    run_case(10, 32, 16, target_block_bytes=8 * 1024, tol=2e-3,
             tag="flat path, padded multi-step grid")
    # Multi-step grid on the natural-layout path (tile divides the batch).
    run_case(10, 8, 128, target_block_bytes=8 * 1024, tol=1e-5,
             tag="natural path, tiled grid")

    print("KERNEL_OK")
</pallas_src>

<mosaic_0001>
module attributes {stable_mosaic.version = 11 : i64} {
  func.func @_eca_flat_kernel(%arg0: i32, %arg1: memref<2x512xf32, #tpu.memory_space<vmem>>, %arg2: memref<512x32xf32, #tpu.memory_space<vmem>>, %arg3: memref<32x512xf32, #tpu.memory_space<vmem>>, %arg4: memref<3xf32, #tpu.memory_space<smem>>, %arg5: memref<2x512xf32, #tpu.memory_space<vmem>>) attributes {dimension_semantics = [#tpu.dimension_semantics<parallel>], iteration_bounds = array<i64: 1>, scalar_prefetch = 0 : i64, scratch_operands = 0 : i64, tpu.core_type = #tpu.core_type<tc>, window_params = [{transform_indices = @transform_0, window_bounds = array<i64: 2, 512>}, {pipeline_mode = #tpu.pipeline_mode<synchronous>, transform_indices = @transform_1, window_bounds = array<i64: 512, 32>}, {pipeline_mode = #tpu.pipeline_mode<synchronous>, transform_indices = @transform_2, window_bounds = array<i64: 32, 512>}, {transform_indices = @transform_3, window_bounds = array<i64: 3>}, {transform_indices = @transform_4, window_bounds = array<i64: 2, 512>}]} {
    %c0 = arith.constant 0 : index
    %c0_0 = arith.constant 0 : index
    %0 = vector.load %arg1[%c0, %c0_0] : memref<2x512xf32, #tpu.memory_space<vmem>>, vector<2x512xf32>
    %c0_1 = arith.constant 0 : index
    %c0_2 = arith.constant 0 : index
    %1 = vector.load %arg2[%c0_1, %c0_2] : memref<512x32xf32, #tpu.memory_space<vmem>>, vector<512x32xf32>
    %cst = arith.constant dense<0.000000e+00> : vector<2x32xf32>
    %2 = tpu.matmul %0, %1, %cst {dimension_numbers = #tpu.dot_dimension_numbers<[1], [0], [0], [1], [0, 0, 1, 1], [], []>} : vector<2x512xf32>, vector<512x32xf32>, vector<2x32xf32> -> vector<2x32xf32>
    %cst_3 = arith.constant 0.000000e+00 : f32
    %3 = vector.broadcast %cst_3 : f32 to vector<2x1xf32>
    %4 = tpu.concatenate %3, %2, %3 in 1 : vector<2x1xf32>, vector<2x32xf32>, vector<2x1xf32> -> vector<2x34xf32>
    %c0_4 = arith.constant 0 : index
    %5 = memref.load %arg4[%c0_4] : memref<3xf32, #tpu.memory_space<smem>>
    %6 = vector.extract_strided_slice %4 {offsets = [0, 0], sizes = [2, 32], strides = [1, 1]} : vector<2x34xf32> to vector<2x32xf32>
    %7 = vector.broadcast %5 : f32 to vector<2x32xf32>
    %8 = arith.mulf %7, %6 : vector<2x32xf32>
    %c1 = arith.constant 1 : index
    %9 = memref.load %arg4[%c1] : memref<3xf32, #tpu.memory_space<smem>>
    %10 = vector.extract_strided_slice %4 {offsets = [0, 1], sizes = [2, 32], strides = [1, 1]} : vector<2x34xf32> to vector<2x32xf32>
    %11 = vector.broadcast %9 : f32 to vector<2x32xf32>
    %12 = arith.mulf %11, %10 : vector<2x32xf32>
    %13 = arith.addf %8, %12 : vector<2x32xf32>
    %c2 = arith.constant 2 : index
    %14 = memref.load %arg4[%c2] : memref<3xf32, #tpu.memory_space<smem>>
    %15 = vector.extract_strided_slice %4 {offsets = [0, 2], sizes = [2, 32], strides = [1, 1]} : vector<2x34xf32> to vector<2x32xf32>
    %16 = vector.broadcast %14 : f32 to vector<2x32xf32>
    %17 = arith.mulf %16, %15 : vector<2x32xf32>
    %18 = arith.addf %13, %17 : vector<2x32xf32>
    %19 = arith.negf %18 : vector<2x32xf32>
    %20 = math.exp %19 : vector<2x32xf32>
    %cst_5 = arith.constant 1.000000e+00 : f32
    %21 = vector.broadcast %cst_5 : f32 to vector<2x32xf32>
    %22 = arith.addf %21, %20 : vector<2x32xf32>
    %23 = arith.divf %21, %22 : vector<2x32xf32>
    %c0_6 = arith.constant 0 : index
    %c0_7 = arith.constant 0 : index
    %24 = vector.load %arg3[%c0_6, %c0_7] : memref<32x512xf32, #tpu.memory_space<vmem>>, vector<32x512xf32>
    %cst_8 = arith.constant dense<0.000000e+00> : vector<2x512xf32>
    %25 = tpu.matmul %23, %24, %cst_8 {dimension_numbers = #tpu.dot_dimension_numbers<[1], [0], [0], [1], [0, 0, 1, 1], [], []>} : vector<2x32xf32>, vector<32x512xf32>, vector<2x512xf32> -> vector<2x512xf32>
    %26 = arith.mulf %0, %25 : vector<2x512xf32>
    %c0_9 = arith.constant 0 : index
    %c0_10 = arith.constant 0 : index
    %27 = vector.load %arg5[%c0_9, %c0_10] : memref<2x512xf32, #tpu.memory_space<vmem>>, vector<2x512xf32>
    tpu.vector_store %arg5[%c0_9, %c0_10], %26 {strides = array<i32>} : memref<2x512xf32, #tpu.memory_space<vmem>>, vector<2x512xf32>,
    return
  }
  func.func @transform_0(%arg0: i32) -> (i32, i32) {
    %c0_i32 = arith.constant 0 : i32
    %c0_i32_0 = arith.constant 0 : i32
    return %arg0, %c0_i32 : i32, i32
  }
  func.func @transform_1(%arg0: i32) -> (i32, i32) {
    %c0_i32 = arith.constant 0 : i32
    %c0_i32_0 = arith.constant 0 : i32
    %c0_i32_1 = arith.constant 0 : i32
    return %c0_i32, %c0_i32_0 : i32, i32
  }
  func.func @transform_2(%arg0: i32) -> (i32, i32) {
    %c0_i32 = arith.constant 0 : i32
    %c0_i32_0 = arith.constant 0 : i32
    %c0_i32_1 = arith.constant 0 : i32
    return %c0_i32, %c0_i32_0 : i32, i32
  }
  func.func @transform_3(%arg0: i32) -> i32 {
    %c0_i32 = arith.constant 0 : i32
    %c0_i32_0 = arith.constant 0 : i32
    return %c0_i32 : i32
  }
  func.func @transform_4(%arg0: i32) -> (i32, i32) {
    %c0_i32 = arith.constant 0 : i32
    %c0_i32_0 = arith.constant 0 : i32
    return %arg0, %c0_i32 : i32, i32
  }
}

</mosaic_0001>

<llo_original>
// kernel: tpu_custom_call.1
$region0: #{tpu_custom_call.1}
  #allocation0 [shape = 'u32[]', space=smem, size = 0x4, offset = 0x4, fixed_abs, tag = 'smem constant byte address 0x4 - core index']
  #allocation1 [shape = 'u32[144,128]{1,0:T(1,128)}', space=vmem, size = 0x12000, scoped, tag = 'internal scratch']
  %s0 = inlined_call_operand.vmem [shape: f32[2,512], index: 0, kind: input, shape index: {}]
  %s1 = inlined_call_operand.vmem [shape: f32[512,32], index: 1, kind: input, shape index: {}]
  %s2 = inlined_call_operand.vmem [shape: f32[32,512], index: 2, kind: input, shape index: {}]
  %s3 = inlined_call_operand.vmem [shape: f32[3], index: 3, kind: input, shape index: {}]
  %s4 = inlined_call_operand.hbm [shape: f32[2,512], index: 4, kind: output, shape index: {}]
  %s5 = sld [smem:[#allocation0]]
  $region30: #{tpu_custom_call.1} parent=0
    _
  %s7 = ssub.s32 1, %s5
  %s8 = scalar_select 0, %s7, %s5
  $region1: #{tpu_custom_call.1} parent=0
    #allocation2 [shape = 'u8[512]{0}', space=smem, size = 0x200, scoped, tag = 'input window, operand 3, single buffered']
    #allocation3 [shape = 's32[1]{0}', space=sflag, size = 0x4, scoped, tag = 'scoped memory for tpu_custom_call.1']
    #allocation4 [shape = 's32[1]{0}', space=sflag, size = 0x4, scoped, tag = 'scoped memory for tpu_custom_call.1']
    #allocation5 [shape = 'u8[4096]{0}', space=vmem, size = 0x1000, scoped, tag = 'output window, operand 0, single buffered']
    %9 = vsyncpa [#allocation4], 0
    %10 = vsyncpa [#allocation3], 0
    // Predicated region
    $region2: #{tpu_custom_call.1} parent=1 // pred_check
      _
    $region3: #{tpu_custom_call.1} parent=1 // pred_check_branch
      %12 = sbr.rel (0) target = $region5
    $region4: #{tpu_custom_call.1} parent=1 // pred_region
      _
    $region5: #{tpu_custom_call.1} parent=1 // pred_fallthru
      _
    // Predicated region
    $region6: #{tpu_custom_call.1} parent=1 // pred_check
      _
    $region7: #{tpu_custom_call.1} parent=1 // pred_check_branch
      %14 = sbr.rel (0) target = $region9
    $region8: #{tpu_custom_call.1} parent=1 // pred_region
      _
    $region9: #{tpu_custom_call.1} parent=1 // pred_fallthru
      _
    // Predicated region
    $region10: #{tpu_custom_call.1} parent=1 // pred_check
      _
    $region11: #{tpu_custom_call.1} parent=1 // pred_check_branch
      %16 = sbr.rel (0) target = $region13
    $region12: #{tpu_custom_call.1} parent=1 // pred_region
      _
    $region13: #{tpu_custom_call.1} parent=1 // pred_fallthru
      _
    // Predicated region
    $region14: #{tpu_custom_call.1} parent=1 // pred_check
      _
    $region15: #{tpu_custom_call.1} parent=1 // pred_check_branch
      %18 = sbr.rel (0) target = $region17
    $region16: #{tpu_custom_call.1} parent=1 // pred_region
      %s20 = ssub.s32 16, 16
      %21 = vsyncadd [#allocation4], %s20
      %s23 = sshll.u32 %s3, 4
      %s24 = int_to_ptr.vmem [resolvable:$true] %s23
      %26 = dma.vmem_to_smem %s24, 16, [#allocation2], [#allocation4]
    $region17: #{tpu_custom_call.1} parent=1 // pred_fallthru
      _
    // Predicated region
    $region18: #{tpu_custom_call.1} parent=1 // pred_check
      _
    $region19: #{tpu_custom_call.1} parent=1 // pred_check_branch
      %28 = sbr.rel (0) target = $region21
    $region20: #{tpu_custom_call.1} parent=1 // pred_region
      %29 = dma.done [#allocation4], 16
    $region21: #{tpu_custom_call.1} parent=1 // pred_fallthru
      _
    %30 = sfence
    %v31 = vld [vmem:[%s0] sm:$0xff]
    %v32 = vld [vmem:[%s1] sm:$0xff]
    %v33 = vld [vmem:[%s1 + $0x8] sm:$0xff]
    %v34 = vld [vmem:[%s1 + $0x10] sm:$0xff]
    %v35 = vld [vmem:[%s1 + $0x18] sm:$0xff]
    %v36 = vld [vmem:[%s1 + $0x20] sm:$0xff]
    %v37 = vld [vmem:[%s1 + $0x28] sm:$0xff]
    %v38 = vld [vmem:[%s1 + $0x30] sm:$0xff]
    %v39 = vld [vmem:[%s1 + $0x38] sm:$0xff]
    %v40 = vld [vmem:[%s1 + $0x40] sm:$0xff]
    %v41 = vld [vmem:[%s1 + $0x48] sm:$0xff]
    %v42 = vld [vmem:[%s1 + $0x50] sm:$0xff]
    %v43 = vld [vmem:[%s1 + $0x58] sm:$0xff]
    %v44 = vld [vmem:[%s1 + $0x60] sm:$0xff]
    %v45 = vld [vmem:[%s1 + $0x68] sm:$0xff]
    %v46 = vld [vmem:[%s1 + $0x70] sm:$0xff]
    %v47 = vld [vmem:[%s1 + $0x78] sm:$0xff]
    %v48 = vld [vmem:[%s1 + $0x80] sm:$0xff]
    %v49 = vld [vmem:[%s1 + $0x88] sm:$0xff]
    %v50 = vld [vmem:[%s1 + $0x90] sm:$0xff]
    %v51 = vld [vmem:[%s1 + $0x98] sm:$0xff]
    %v52 = vld [vmem:[%s1 + $0xa0] sm:$0xff]
    %v53 = vld [vmem:[%s1 + $0xa8] sm:$0xff]
    %v54 = vld [vmem:[%s1 + $0xb0] sm:$0xff]
    %v55 = vld [vmem:[%s1 + $0xb8] sm:$0xff]
    %v56 = vld [vmem:[%s1 + $0xc0] sm:$0xff]
    %v57 = vld [vmem:[%s1 + $0xc8] sm:$0xff]
    %v58 = vld [vmem:[%s1 + $0xd0] sm:$0xff]
    %v59 = vld [vmem:[%s1 + $0xd8] sm:$0xff]
    %v60 = vld [vmem:[%s1 + $0xe0] sm:$0xff]
    %v61 = vld [vmem:[%s1 + $0xe8] sm:$0xff]
    %v62 = vld [vmem:[%s1 + $0xf0] sm:$0xff]
    %v63 = vld [vmem:[%s1 + $0xf8] sm:$0xff]
    %v64 = vld [vmem:[%s1 + $0x100] sm:$0xff]
    %v65 = vld [vmem:[%s1 + $0x108] sm:$0xff]
    %v66 = vld [vmem:[%s1 + $0x110] sm:$0xff]
    %v67 = vld [vmem:[%s1 + $0x118] sm:$0xff]
    %v68 = vld [vmem:[%s1 + $0x120] sm:$0xff]
    %v69 = vld [vmem:[%s1 + $0x128] sm:$0xff]
    %v70 = vld [vmem:[%s1 + $0x130] sm:$0xff]
    %v71 = vld [vmem:[%s1 + $0x138] sm:$0xff]
    %v72 = vld [vmem:[%s1 + $0x140] sm:$0xff]
    %v73 = vld [vmem:[%s1 + $0x148] sm:$0xff]
    %v74 = vld [vmem:[%s1 + $0x150] sm:$0xff]
    %v75 = vld [vmem:[%s1 + $0x158] sm:$0xff]
    %v76 = vld [vmem:[%s1 + $0x160] sm:$0xff]
    %v77 = vld [vmem:[%s1 + $0x168] sm:$0xff]
    %v78 = vld [vmem:[%s1 + $0x170] sm:$0xff]
    %v79 = vld [vmem:[%s1 + $0x178] sm:$0xff]
    %v80 = vld [vmem:[%s1 + $0x180] sm:$0xff]
    %v81 = vld [vmem:[%s1 + $0x188] sm:$0xff]
    %v82 = vld [vmem:[%s1 + $0x190] sm:$0xff]
    %v83 = vld [vmem:[%s1 + $0x198] sm:$0xff]
    %v84 = vld [vmem:[%s1 + $0x1a0] sm:$0xff]
    %v85 = vld [vmem:[%s1 + $0x1a8] sm:$0xff]
    %v86 = vld [vmem:[%s1 + $0x1b0] sm:$0xff]
    %v87 = vld [vmem:[%s1 + $0x1b8] sm:$0xff]
    %v88 = vld [vmem:[%s1 + $0x1c0] sm:$0xff]
    %v89 = vld [vmem:[%s1 + $0x1c8] sm:$0xff]
    %v90 = vld [vmem:[%s1 + $0x1d0] sm:$0xff]
    %v91 = vld [vmem:[%s1 + $0x1d8] sm:$0xff]
    %v92 = vld [vmem:[%s1 + $0x1e0] sm:$0xff]
    %v93 = vld [vmem:[%s1 + $0x1e8] sm:$0xff]
    %v94 = vld [vmem:[%s1 + $0x1f0] sm:$0xff]
    %v95 = vld [vmem:[%s1 + $0x1f8] sm:$0xff]
    %v97 = vcombine.high %v31, %v31
    %v99 = vunpack.c.l.s4 1983009808
    %v100 = vunpack.c.0.s8 %v99
    %v101 = vlaneseq
    %v102 = vshrl.u32 %v101, 7
    %v103 = vsub.s32 %v100, %v102
    %v104 = vrot.slane %v31, %v103
    %v106 = vunpack.c.l.s4 1983009808
    %v107 = vunpack.c.0.s8 %v106
    %v108 = vlaneseq
    %v109 = vshrl.u32 %v108, 7
    %v110 = vsub.s32 %v107, %v109
    %v111 = vrot.slane %v97, %v110
    %v112 = vcombine.high %v104, %v104
    %v113 = vcombine.high %v111, %v111
    %118 = vmatprep.subr.mxu0 0.0
    %119 = vmatpush1.msra.mxu0 %v47
    %120 = vmatprep.subr.mxu0 0.0
    %121 = vmatpush1.msra.mxu0 %v46
    %122 = vmatprep.subr.mxu0 0.0
    %123 = vmatpush1.msra.mxu0 %v45
    %124 = vmatprep.subr.mxu0 0.0
    %125 = vmatpush1.msra.mxu0 %v44
    %126 = vmatprep.subr.mxu0 0.0
    %127 = vmatpush1.msra.mxu0 %v43
    %128 = vmatprep.subr.mxu0 0.0
    %129 = vmatpush1.msra.mxu0 %v42
    %130 = vmatprep.subr.mxu0 0.0
    %131 = vmatpush1.msra.mxu0 %v41
    %132 = vmatprep.subr.mxu0 0.0
    %133 = vmatpush1.msra.mxu0 %v40
    %134 = vmatprep.subr.mxu0 0.0
    %135 = vmatpush1.msra.mxu0 %v39
    %136 = vmatprep.subr.mxu0 0.0
    %137 = vmatpush1.msra.mxu0 %v38
    %138 = vmatprep.subr.mxu0 0.0
    %139 = vmatpush1.msra.mxu0 %v37
    %140 = vmatprep.subr.mxu0 0.0
    %141 = vmatpush1.msra.mxu0 %v36
    %142 = vmatprep.subr.mxu0 0.0
    %143 = vmatpush1.msra.mxu0 %v35
    %144 = vmatprep.subr.mxu0 0.0
    %145 = vmatpush1.msra.mxu0 %v34
    %146 = vmatprep.subr.mxu0 0.0
    %147 = vmatpush1.msra.mxu0 %v33
    %148 = vmatprep.subr.mxu0 0.0
    %149 = vmatpush1.msra.mxu0 %v32
    %150 = vmatprep.subr.mxu0 0.0
    %151 = vmatpush2.msra.mxu0 %v63
    %152 = vmatprep.subr.mxu0 0.0
    %153 = vmatpush2.msra.mxu0 %v62
    %154 = vmatprep.subr.mxu0 0.0
    %155 = vmatpush2.msra.mxu0 %v61
    %156 = vmatprep.subr.mxu0 0.0
    %157 = vmatpush2.msra.mxu0 %v60
    %158 = vmatprep.subr.mxu0 0.0
    %159 = vmatpush2.msra.mxu0 %v59
    %160 = vmatprep.subr.mxu0 0.0
    %161 = vmatpush2.msra.mxu0 %v58
    %162 = vmatprep.subr.mxu0 0.0
    %163 = vmatpush2.msra.mxu0 %v57
    %164 = vmatprep.subr.mxu0 0.0
    %165 = vmatpush2.msra.mxu0 %v56
    %166 = vmatprep.subr.mxu0 0.0
    %167 = vmatpush2.msra.mxu0 %v55
    %168 = vmatprep.subr.mxu0 0.0
    %169 = vmatpush2.msra.mxu0 %v54
    %170 = vmatprep.subr.mxu0 0.0
    %171 = vmatpush2.msra.mxu0 %v53
    %172 = vmatprep.subr.mxu0 0.0
    %173 = vmatpush2.msra.mxu0 %v52
    %174 = vmatprep.subr.mxu0 0.0
    %175 = vmatpush2.msra.mxu0 %v51
    %176 = vmatprep.subr.mxu0 0.0
    %177 = vmatpush2.msra.mxu0 %v50
    %178 = vmatprep.subr.mxu0 0.0
    %179 = vmatpush2.msra.mxu0 %v49
    %180 = vmatprep.subr.mxu0 0.0
    %181 = vmatpush2.msra.mxu0 %v48
    %182 = vmatprep.mubr.f32.mxu0 %v112
    %183 = vmatmul.mubr.f32.gmra.mxu0 %v104
    %v184 = vpop.f32.mrf.mxu0
    %v185 = vadd.f32 0.0, %v184
    %v186 = vpop.f32.mrf.mxu0
    %187 = vdwg.mxu0
    %188 = vmatprep.subr.mxu0 0.0
    %189 = vmatpush1.msra.mxu0 %v79
    %190 = vmatprep.subr.mxu0 0.0
    %191 = vmatpush1.msra.mxu0 %v78
    %192 = vmatprep.subr.mxu0 0.0
    %193 = vmatpush1.msra.mxu0 %v77
    %194 = vmatprep.subr.mxu0 0.0
    %195 = vmatpush1.msra.mxu0 %v76
    %196 = vmatprep.subr.mxu0 0.0
    %197 = vmatpush1.msra.mxu0 %v75
    %198 = vmatprep.subr.mxu0 0.0
    %199 = vmatpush1.msra.mxu0 %v74
    %200 = vmatprep.subr.mxu0 0.0
    %201 = vmatpush1.msra.mxu0 %v73
    %202 = vmatprep.subr.mxu0 0.0
    %203 = vmatpush1.msra.mxu0 %v72
    %204 = vmatprep.subr.mxu0 0.0
    %205 = vmatpush1.msra.mxu0 %v71
    %206 = vmatprep.subr.mxu0 0.0
    %207 = vmatpush1.msra.mxu0 %v70
    %208 = vmatprep.subr.mxu0 0.0
    %209 = vmatpush1.msra.mxu0 %v69
    %210 = vmatprep.subr.mxu0 0.0
    %211 = vmatpush1.msra.mxu0 %v68
    %212 = vmatprep.subr.mxu0 0.0
    %213 = vmatpush1.msra.mxu0 %v67
    %214 = vmatprep.subr.mxu0 0.0
    %215 = vmatpush1.msra.mxu0 %v66
    %216 = vmatprep.subr.mxu0 0.0
    %217 = vmatpush1.msra.mxu0 %v65
    %218 = vmatprep.subr.mxu0 0.0
    %219 = vmatpush1.msra.mxu0 %v64
    %220 = vmatprep.subr.mxu0 0.0
    %221 = vmatpush2.msra.mxu0 %v95
    %222 = vmatprep.subr.mxu0 0.0
    %223 = vmatpush2.msra.mxu0 %v94
    %224 = vmatprep.subr.mxu0 0.0
    %225 = vmatpush2.msra.mxu0 %v93
    %226 = vmatprep.subr.mxu0 0.0
    %227 = vmatpush2.msra.mxu0 %v92
    %228 = vmatprep.subr.mxu0 0.0
    %229 = vmatpush2.msra.mxu0 %v91
    %230 = vmatprep.subr.mxu0 0.0
    %231 = vmatpush2.msra.mxu0 %v90
    %232 = vmatprep.subr.mxu0 0.0
    %233 = vmatpush2.msra.mxu0 %v89
    %234 = vmatprep.subr.mxu0 0.0
    %235 = vmatpush2.msra.mxu0 %v88
    %236 = vmatprep.subr.mxu0 0.0
    %237 = vmatpush2.msra.mxu0 %v87
    %238 = vmatprep.subr.mxu0 0.0
    %239 = vmatpush2.msra.mxu0 %v86
    %240 = vmatprep.subr.mxu0 0.0
    %241 = vmatpush2.msra.mxu0 %v85
    %242 = vmatprep.subr.mxu0 0.0
    %243 = vmatpush2.msra.mxu0 %v84
    %244 = vmatprep.subr.mxu0 0.0
    %245 = vmatpush2.msra.mxu0 %v83
    %246 = vmatprep.subr.mxu0 0.0
    %247 = vmatpush2.msra.mxu0 %v82
    %248 = vmatprep.subr.mxu0 0.0
    %249 = vmatpush2.msra.mxu0 %v81
    %250 = vmatprep.subr.mxu0 0.0
    %251 = vmatpush2.msra.mxu0 %v80
    %252 = vmatprep.mubr.f32.mxu0 %v113
    %253 = vmatmul.mubr.f32.gmra.mxu0 %v111
    %v254 = vpop.f32.mrf.mxu0
    %v255 = vadd.f32 %v185, %v254
    %v256 = vpop.f32.mrf.mxu0
    %257 = vdwg.mxu0
    %259 = vrot.lane.b32.xlu0 %v255, 1
    %v260 = vpop.permute.xlu0 %259
    %vm262 = vcmask 7168
    %v263 = vsel %vm262, 0.0, %v260
    %vm264 = vcmask 269312
    %v265 = vsel %vm264, %v263, 0.0
    %s266 = sld [smem:[#allocation2]]
    %v267 = vstv %s266
    %v268 = vmul.f32 %v267, %v265
    %s269 = sld [smem:[#allocation2 + $0x1]]
    %v270 = vstv %s269
    %v271 = vmul.f32 %v270, %v265
    %273 = vrot.lane.b32.xlu0 %v271, 127
    %v274 = vpop.permute.xlu0 %273
    %v276 = vadd.f32 %v268, %v274
    %s277 = sld [smem:[#allocation2 + $0x2]]
    %v278 = vstv %s277
    %v279 = vmul.f32 %v278, %v265
    %281 = vrot.lane.b32.xlu0 %v279, 126
    %v282 = vpop.permute.xlu0 %281
    %v284 = vadd.f32 %v276, %v282
    %v285 = vxor.u32 %v284, 2147483648
    %v286 = vmul.f32 %v285, 1.442695
    %v287 = vpow.pop %v286
    %v288 = vadd.f32 %v287, 1.0
    %v289 = vrcp.pop %v288
    %v290 = vmul.f32 1.0, %v289
    %v291 = vld [vmem:[%s2] sm:$0xff]
    %v292 = vld [vmem:[%s2 + $0x8] sm:$0xff]
    %v293 = vld [vmem:[%s2 + $0x10] sm:$0xff]
    %v294 = vld [vmem:[%s2 + $0x18] sm:$0xff]
    %v295 = vld [vmem:[%s2 + $0x20] sm:$0xff]
    %v296 = vld [vmem:[%s2 + $0x28] sm:$0xff]
    %v297 = vld [vmem:[%s2 + $0x30] sm:$0xff]
    %v298 = vld [vmem:[%s2 + $0x38] sm:$0xff]
    %v299 = vld [vmem:[%s2 + $0x40] sm:$0xff]
    %v300 = vld [vmem:[%s2 + $0x48] sm:$0xff]
    %v301 = vld [vmem:[%s2 + $0x50] sm:$0xff]
    %v302 = vld [vmem:[%s2 + $0x58] sm:$0xff]
    %v303 = vld [vmem:[%s2 + $0x60] sm:$0xff]
    %v304 = vld [vmem:[%s2 + $0x68] sm:$0xff]
    %v305 = vld [vmem:[%s2 + $0x70] sm:$0xff]
    %v306 = vld [vmem:[%s2 + $0x78] sm:$0xff]
    %vm307 = vcmask 261120
    %v309 = vsel %vm307, %v290, 0
    %311 = vmatprep.subr.mxu0 0.0
    %312 = vmatpush1.msra.mxu0 0.0
    %313 = vmatprep.subr.mxu0 0.0
    %314 = vmatpush1.msra.mxu0 0.0
    %315 = vmatprep.subr.mxu0 0.0
    %316 = vmatpush1.msra.mxu0 0.0
    %317 = vmatprep.subr.mxu0 0.0
    %318 = vmatpush1.msra.mxu0 0.0
    %319 = vmatprep.subr.mxu0 0.0
    %320 = vmatpush1.msra.mxu0 0.0
    %321 = vmatprep.subr.mxu0 0.0
    %322 = vmatpush1.msra.mxu0 0.0
    %323 = vmatprep.subr.mxu0 0.0
    %324 = vmatpush1.msra.mxu0 0.0
    %325 = vmatprep.subr.mxu0 0.0
    %326 = vmatpush1.msra.mxu0 0.0
    %327 = vmatprep.subr.mxu0 0.0
    %328 = vmatpush1.msra.mxu0 0.0
    %329 = vmatprep.subr.mxu0 0.0
    %330 = vmatpush1.msra.mxu0 0.0
    %331 = vmatprep.subr.mxu0 0.0
    %332 = vmatpush1.msra.mxu0 0.0
    %333 = vmatprep.subr.mxu0 0.0
    %334 = vmatpush1.msra.mxu0 0.0
    %335 = vmatprep.subr.mxu0 %v304
    %336 = vmatpush1.msra.mxu0 %v303
    %337 = vmatprep.subr.mxu0 %v300
    %338 = vmatpush1.msra.mxu0 %v299
    %339 = vmatprep.subr.mxu0 %v296
    %340 = vmatpush1.msra.mxu0 %v295
    %341 = vmatprep.subr.mxu0 %v292
    %342 = vmatpush1.msra.mxu0 %v291
    %343 = vmatprep.subr.mxu0 0.0
    %344 = vmatpush2.msra.mxu0 0.0
    %345 = vmatprep.subr.mxu0 0.0
    %346 = vmatpush2.msra.mxu0 0.0
    %347 = vmatprep.subr.mxu0 0.0
    %348 = vmatpush2.msra.mxu0 0.0
    %349 = vmatprep.subr.mxu0 0.0
    %350 = vmatpush2.msra.mxu0 0.0
    %351 = vmatprep.subr.mxu0 0.0
    %352 = vmatpush2.msra.mxu0 0.0
    %353 = vmatprep.subr.mxu0 0.0
    %354 = vmatpush2.msra.mxu0 0.0
    %355 = vmatprep.subr.mxu0 0.0
    %356 = vmatpush2.msra.mxu0 0.0
    %357 = vmatprep.subr.mxu0 0.0
    %358 = vmatpush2.msra.mxu0 0.0
    %359 = vmatprep.subr.mxu0 0.0
    %360 = vmatpush2.msra.mxu0 0.0
    %361 = vmatprep.subr.mxu0 0.0
    %362 = vmatpush2.msra.mxu0 0.0
    %363 = vmatprep.subr.mxu0 0.0
    %364 = vmatpush2.msra.mxu0 0.0
    %365 = vmatprep.subr.mxu0 0.0
    %366 = vmatpush2.msra.mxu0 0.0
    %367 = vmatprep.subr.mxu0 0.0
    %368 = vmatpush2.msra.mxu0 0.0
    %369 = vmatprep.subr.mxu0 0.0
    %370 = vmatpush2.msra.mxu0 0.0
    %371 = vmatprep.subr.mxu0 0.0
    %372 = vmatpush2.msra.mxu0 0.0
    %373 = vmatprep.subr.mxu0 0.0
    %374 = vmatpush2.msra.mxu0 0.0
    %375 = vmatprep.mubr.f32.mxu0 0.0
    %376 = vmatmul.mubr.f32.gmra.mxu0 %v309
    %v377 = vpop.f32.mrf.mxu0
    %v378 = vadd.f32 0.0, %v377
    %v379 = vpop.f32.mrf.mxu0
    %v380 = vadd.f32 0.0, %v379
    %381 = vdwg.mxu0
    %382 = vmatprep.subr.mxu0 0.0
    %383 = vmatpush1.msra.mxu0 0.0
    %384 = vmatprep.subr.mxu0 0.0
    %385 = vmatpush1.msra.mxu0 0.0
    %386 = vmatprep.subr.mxu0 0.0
    %387 = vmatpush1.msra.mxu0 0.0
    %388 = vmatprep.subr.mxu0 0.0
    %389 = vmatpush1.msra.mxu0 0.0
    %390 = vmatprep.subr.mxu0 0.0
    %391 = vmatpush1.msra.mxu0 0.0
    %392 = vmatprep.subr.mxu0 0.0
    %393 = vmatpush1.msra.mxu0 0.0
    %394 = vmatprep.subr.mxu0 0.0
    %395 = vmatpush1.msra.mxu0 0.0
    %396 = vmatprep.subr.mxu0 0.0
    %397 = vmatpush1.msra.mxu0 0.0
    %398 = vmatprep.subr.mxu0 0.0
    %399 = vmatpush1.msra.mxu0 0.0
    %400 = vmatprep.subr.mxu0 0.0
    %401 = vmatpush1.msra.mxu0 0.0
    %402 = vmatprep.subr.mxu0 0.0
    %403 = vmatpush1.msra.mxu0 0.0
    %404 = vmatprep.subr.mxu0 0.0
    %405 = vmatpush1.msra.mxu0 0.0
    %406 = vmatprep.subr.mxu0 %v306
    %407 = vmatpush1.msra.mxu0 %v305
    %408 = vmatprep.subr.mxu0 %v302
    %409 = vmatpush1.msra.mxu0 %v301
    %410 = vmatprep.subr.mxu0 %v298
    %411 = vmatpush1.msra.mxu0 %v297
    %412 = vmatprep.subr.mxu0 %v294
    %413 = vmatpush1.msra.mxu0 %v293
    %414 = vmatprep.subr.mxu0 0.0
    %415 = vmatpush2.msra.mxu0 0.0
    %416 = vmatprep.subr.mxu0 0.0
    %417 = vmatpush2.msra.mxu0 0.0
    %418 = vmatprep.subr.mxu0 0.0
    %419 = vmatpush2.msra.mxu0 0.0
    %420 = vmatprep.subr.mxu0 0.0
    %421 = vmatpush2.msra.mxu0 0.0
    %422 = vmatprep.subr.mxu0 0.0
    %423 = vmatpush2.msra.mxu0 0.0
    %424 = vmatprep.subr.mxu0 0.0
    %425 = vmatpush2.msra.mxu0 0.0
    %426 = vmatprep.subr.mxu0 0.0
    %427 = vmatpush2.msra.mxu0 0.0
    %428 = vmatprep.subr.mxu0 0.0
    %429 = vmatpush2.msra.mxu0 0.0
    %430 = vmatprep.subr.mxu0 0.0
    %431 = vmatpush2.msra.mxu0 0.0
    %432 = vmatprep.subr.mxu0 0.0
    %433 = vmatpush2.msra.mxu0 0.0
    %434 = vmatprep.subr.mxu0 0.0
    %435 = vmatpush2.msra.mxu0 0.0
    %436 = vmatprep.subr.mxu0 0.0
    %437 = vmatpush2.msra.mxu0 0.0
    %438 = vmatprep.subr.mxu0 0.0
    %439 = vmatpush2.msra.mxu0 0.0
    %440 = vmatprep.subr.mxu0 0.0
    %441 = vmatpush2.msra.mxu0 0.0
    %442 = vmatprep.subr.mxu0 0.0
    %443 = vmatpush2.msra.mxu0 0.0
    %444 = vmatprep.subr.mxu0 0.0
    %445 = vmatpush2.msra.mxu0 0.0
    %446 = vmatprep.mubr.f32.mxu0 0.0
    %447 = vmatmul.mubr.f32.gmra.mxu0 %v309
    %v448 = vpop.f32.mrf.mxu0
    %v449 = vadd.f32 0.0, %v448
    %v450 = vpop.f32.mrf.mxu0
    %v451 = vadd.f32 0.0, %v450
    %452 = vdwg.mxu0
    %v457 = vcombine.low %v378, %v380
    %v458 = vcombine.low %v449, %v451
    %v460 = vunpack.c.l.s4 1983009808
    %v461 = vunpack.c.0.s8 %v460
    %v462 = vlaneseq
    %v463 = vshrl.u32 %v462, 7
    %v464 = vsub.s32 %v461, %v463
    %v465 = vrot.slane %v457, %v464
    %v467 = vunpack.c.l.s4 1983009808
    %v468 = vunpack.c.0.s8 %v467
    %v469 = vlaneseq
    %v470 = vshrl.u32 %v469, 7
    %v471 = vsub.s32 %v468, %v470
    %v472 = vrot.slane %v458, %v471
    %v473 = vcombine.low %v465, %v472
    %v475 = vmul.f32 %v31, %v473
    %476 = vst [vmem:[#allocation5] sm:$0xff] %v475
    // Predicated region
    $region22: #{tpu_custom_call.1} parent=1 // pred_check
      _
    $region23: #{tpu_custom_call.1} parent=1 // pred_check_branch
      %478 = sbr.rel (0) target = $region25
    $region24: #{tpu_custom_call.1} parent=1 // pred_region
      %s480 = ssub.s32 128, 128
      %481 = vsyncadd [#allocation3], %s480
      %s483 = sshll.u32 [#allocation5], 4
      %s484 = int_to_ptr.vmem [resolvable:$true] %s483
      %486 = dma.vmem_to_hbm [thread:$0]  %s484, 128, %s4, [#allocation3]
    $region25: #{tpu_custom_call.1} parent=1 // pred_fallthru
      _
    // Predicated region
    $region26: #{tpu_custom_call.1} parent=1 // pred_check
      _
    $region27: #{tpu_custom_call.1} parent=1 // pred_check_branch
      %488 = sbr.rel (0) target = $region29
    $region28: #{tpu_custom_call.1} parent=1 // pred_region
      %489 = dma.done [#allocation3], 128
    $region29: #{tpu_custom_call.1} parent=1 // pred_fallthru
      _
    %490 = vsyncpa [#allocation3], 1
    %491 = vsyncpa [#allocation4], 1

</llo_original>
